<compile_context>
chip_gen: v5e
topology: v5e:2x2
jax: 0.10.0
libtpu: 0.0.40
codegen_flags: <defaults>
</compile_context>

<pallas_src>
import functools

import jax
import jax.numpy as jnp
from jax.experimental import pallas as pl
from jax.experimental.pallas import tpu as pltpu

HIDDEN = 128
MAX_BLOCK_B = 512      # 512-1024-row tiles reach ~85% of HBM roofline; VMEM is tiny here
TINY_BATCH = 128       # below this, fused XLA beats custom-call + DMA overhead
                       # TODO(synk): re-benchmark crossover after wrapper ops removed (maybe 256-512)
USE_CORE_PARALLEL = False  # flip True on v7x (2 TCs/chip) to shard batch tiles across cores


def _round_up(x, m):
    return ((x + m - 1) // m) * m


def dqn_kernel(x_ref, w1_ref, b1_ref, w2_ref, b2_ref, w3_ref, b3_ref, o_ref):
    # x arrives f32 (single 4 B/elt HBM read); cast to bf16 on-chip for the MXU.
    x = x_ref[...].astype(jnp.bfloat16)
    # Linear(in_dim, 128) + ReLU  (bf16 operands, f32 accumulate / bias / ReLU)
    h1 = jnp.dot(x, w1_ref[...], preferred_element_type=jnp.float32)
    h1 = jnp.maximum(h1 + b1_ref[...], 0.0).astype(jnp.bfloat16)
    # Linear(128, 128) + ReLU
    h2 = jnp.dot(h1, w2_ref[...], preferred_element_type=jnp.float32)
    h2 = jnp.maximum(h2 + b2_ref[...], 0.0).astype(jnp.bfloat16)
    # Linear(128, out_dim) -- unpadded store: masked vst but 16x less HBM writeback
    # than a 128-lane-padded f32 store, and no slice pass in the wrapper.
    out = jnp.dot(h2, w3_ref[...], preferred_element_type=jnp.float32) + b3_ref[...]
    o_ref[...] = out.astype(o_ref.dtype)


@functools.partial(jax.jit, static_argnames=("block_b",))
def _dqn_pallas(x, params, block_b):
    B, in_dim = x.shape
    out_dim = params["w3"].shape[1]
    n_blocks = pl.cdiv(B, block_b)   # no batch padding; Pallas masks the tail tile

    full = lambda i: (0, 0)          # constant index_map -> stays resident in VMEM

    flops = 2 * B * (in_dim * HIDDEN + HIDDEN * HIDDEN + HIDDEN * out_dim)
    bytes_accessed = (
        B * in_dim * 4                                                   # x (f32)
        + 2 * (in_dim * HIDDEN + HIDDEN * HIDDEN + HIDDEN * out_dim)     # bf16 weights
        + 4 * (2 * HIDDEN + out_dim)                                     # f32 biases
        + B * out_dim * 4                                                # output (f32)
    )

    semantics = (pltpu.CORE_PARALLEL,) if USE_CORE_PARALLEL else ("parallel",)

    return pl.pallas_call(
        dqn_kernel,
        out_shape=jax.ShapeDtypeStruct((B, out_dim), jnp.float32),
        grid_spec=pltpu.PrefetchScalarGridSpec(
            num_scalar_prefetch=0,
            grid=(n_blocks,),
            in_specs=[
                pl.BlockSpec((block_b, in_dim), lambda i: (i, 0)),
                pl.BlockSpec((in_dim, HIDDEN), full),
                pl.BlockSpec((1, HIDDEN), full),
                pl.BlockSpec((HIDDEN, HIDDEN), full),
                pl.BlockSpec((1, HIDDEN), full),
                pl.BlockSpec((HIDDEN, out_dim), full),
                pl.BlockSpec((1, out_dim), full),
            ],
            out_specs=pl.BlockSpec((block_b, out_dim), lambda i: (i, 0)),
        ),
        compiler_params=pltpu.CompilerParams(dimension_semantics=semantics),
        cost_estimate=pl.CostEstimate(
            flops=flops, transcendentals=0, bytes_accessed=bytes_accessed),
    )(x, params["w1"], params["b1"], params["w2"], params["b2"],
      params["w3"], params["b3"])


@jax.jit
def _dqn_xla(x, p):
    # Tiny-batch fallback: let XLA fuse the whole MLP (bf16 weights promote to f32).
    h1 = jnp.maximum(x @ p["w1"] + p["b1"], 0.0)
    h2 = jnp.maximum(h1 @ p["w2"] + p["b2"], 0.0)
    return h2 @ p["w3"] + p["b3"]


def dqn_forward(x, params):
    """x: [B, input_dim] float32.  params: output of prepare_params()."""
    B = x.shape[0]
    if B <= TINY_BATCH:
        return _dqn_xla(x, params)
    # Largest multiple-of-8 tile that fits in the batch (so blocks never exceed B);
    # the last tile may be partial and is masked by Pallas.
    block_b = min(MAX_BLOCK_B, max(8, (B // 8) * 8))
    if USE_CORE_PARALLEL:
        # Ensure >= 2 grid steps so both v7x TensorCores get work.
        block_b = min(block_b, max(8, _round_up(pl.cdiv(B, 2), 8)))
    return _dqn_pallas(x, params, block_b=block_b)


def init_params(key, input_dim, output_dim):
    """f32 master params mimicking nn.Linear defaults, stored pre-transposed [in, out]."""
    def linear(k, fan_in, fan_out):
        kw, kb = jax.random.split(k)
        bound = 1.0 / jnp.sqrt(fan_in)
        w = jax.random.uniform(kw, (fan_in, fan_out), jnp.float32, -bound, bound)
        b = jax.random.uniform(kb, (1, fan_out), jnp.float32, -bound, bound)
        return w, b

    k1, k2, k3 = jax.random.split(key, 3)
    w1, b1 = linear(k1, input_dim, HIDDEN)
    w2, b2 = linear(k2, HIDDEN, HIDDEN)
    w3, b3 = linear(k3, HIDDEN, output_dim)
    return {"w1": w1, "b1": b1, "w2": w2, "b2": b2, "w3": w3, "b3": b3}


def prepare_params(params_f32):
    """One-time conversion for the kernel: bf16 matmul weights, f32 row-vector biases.
    Do this once outside the train/act loop so no per-call cast/pad ops remain."""
    return {
        "w1": params_f32["w1"].astype(jnp.bfloat16),
        "b1": params_f32["b1"].reshape(1, -1).astype(jnp.float32),
        "w2": params_f32["w2"].astype(jnp.bfloat16),
        "b2": params_f32["b2"].reshape(1, -1).astype(jnp.float32),
        "w3": params_f32["w3"].astype(jnp.bfloat16),
        "b3": params_f32["b3"].reshape(1, -1).astype(jnp.float32),
    }


def dqn_ref(x, p):
    h1 = jnp.maximum(x @ p["w1"] + p["b1"], 0.0)
    h2 = jnp.maximum(h1 @ p["w2"] + p["b2"], 0.0)
    return h2 @ p["w3"] + p["b3"]


if __name__ == "__main__":
    key = jax.random.PRNGKey(0)
    kx1, kx2, kx3, kp = jax.random.split(key, 4)

    input_dim, output_dim = 32, 8
    params_f32 = init_params(kp, input_dim, output_dim)
    params = prepare_params(params_f32)   # one-time bf16 prep

    # Replay-buffer-sized batch -> Pallas path, one full 512-row MXU tile.
    x1 = jax.random.normal(kx1, (512, input_dim), jnp.float32)
    out1 = jax.block_until_ready(dqn_forward(x1, params))
    ref1 = dqn_ref(x1, params_f32)
    assert out1.shape == (512, output_dim)
    # bf16 operands with f32 accumulation -> loosened tolerance vs f32 reference.
    assert jnp.max(jnp.abs(out1 - ref1)) < 5e-2, "mismatch vs reference (batch=512)"

    # Ragged batch -> partial tail tile with masked writeback (no wrapper-side padding).
    x2 = jax.random.normal(kx2, (300, input_dim), jnp.float32)
    out2 = jax.block_until_ready(dqn_forward(x2, params))
    ref2 = dqn_ref(x2, params_f32)
    assert out2.shape == (300, output_dim)
    assert jnp.max(jnp.abs(out2 - ref2)) < 5e-2, "mismatch vs reference (batch=300)"

    # Tiny batch (online action selection) -> fused-XLA fallback.
    x3 = jax.random.normal(kx3, (16, input_dim), jnp.float32)
    out3 = jax.block_until_ready(dqn_forward(x3, params))
    ref3 = dqn_ref(x3, params_f32)
    assert out3.shape == (16, output_dim)
    assert jnp.max(jnp.abs(out3 - ref3)) < 5e-2, "mismatch vs reference (batch=16)"

    print("KERNEL_OK")
</pallas_src>

<mosaic_0001>
module attributes {stable_mosaic.version = 11 : i64} {
  func.func @dqn_kernel(%arg0: i32, %arg1: memref<512x32xf32, #tpu.memory_space<vmem>>, %arg2: memref<32x128xbf16, #tpu.memory_space<vmem>>, %arg3: memref<1x128xf32, #tpu.memory_space<vmem>>, %arg4: memref<128x128xbf16, #tpu.memory_space<vmem>>, %arg5: memref<1x128xf32, #tpu.memory_space<vmem>>, %arg6: memref<128x8xbf16, #tpu.memory_space<vmem>>, %arg7: memref<1x8xf32, #tpu.memory_space<vmem>>, %arg8: memref<512x8xf32, #tpu.memory_space<vmem>>) attributes {dimension_semantics = [#tpu.dimension_semantics<parallel>], iteration_bounds = array<i64: 1>, scalar_prefetch = 0 : i64, scratch_operands = 0 : i64, tpu.core_type = #tpu.core_type<tc>, window_params = [{transform_indices = @transform_0, window_bounds = array<i64: 512, 32>}, {pipeline_mode = #tpu.pipeline_mode<synchronous>, transform_indices = @transform_1, window_bounds = array<i64: 32, 128>}, {pipeline_mode = #tpu.pipeline_mode<synchronous>, transform_indices = @transform_2, window_bounds = array<i64: 1, 128>}, {pipeline_mode = #tpu.pipeline_mode<synchronous>, transform_indices = @transform_3, window_bounds = array<i64: 128, 128>}, {pipeline_mode = #tpu.pipeline_mode<synchronous>, transform_indices = @transform_4, window_bounds = array<i64: 1, 128>}, {pipeline_mode = #tpu.pipeline_mode<synchronous>, transform_indices = @transform_5, window_bounds = array<i64: 128, 8>}, {pipeline_mode = #tpu.pipeline_mode<synchronous>, transform_indices = @transform_6, window_bounds = array<i64: 1, 8>}, {transform_indices = @transform_7, window_bounds = array<i64: 512, 8>}]} {
    %c0 = arith.constant 0 : index
    %c0_0 = arith.constant 0 : index
    %0 = vector.load %arg1[%c0, %c0_0] : memref<512x32xf32, #tpu.memory_space<vmem>>, vector<512x32xf32>
    %1 = arith.truncf %0 : vector<512x32xf32> to vector<512x32xbf16>
    %c0_1 = arith.constant 0 : index
    %c0_2 = arith.constant 0 : index
    %2 = vector.load %arg2[%c0_1, %c0_2] : memref<32x128xbf16, #tpu.memory_space<vmem>>, vector<32x128xbf16>
    %cst = arith.constant dense<0.000000e+00> : vector<512x128xf32>
    %3 = tpu.matmul %1, %2, %cst {dimension_numbers = #tpu.dot_dimension_numbers<[1], [0], [0], [1], [0, 0, 1, 1], [], []>} : vector<512x32xbf16>, vector<32x128xbf16>, vector<512x128xf32> -> vector<512x128xf32>
    %c0_3 = arith.constant 0 : index
    %c0_4 = arith.constant 0 : index
    %4 = vector.load %arg3[%c0_3, %c0_4] : memref<1x128xf32, #tpu.memory_space<vmem>>, vector<1x128xf32>
    %5 = vector.broadcast %4 : vector<1x128xf32> to vector<512x128xf32>
    %6 = arith.addf %3, %5 : vector<512x128xf32>
    %cst_5 = arith.constant 0.000000e+00 : f32
    %7 = vector.broadcast %cst_5 : f32 to vector<512x128xf32>
    %8 = arith.maximumf %6, %7 : vector<512x128xf32>
    %9 = arith.truncf %8 : vector<512x128xf32> to vector<512x128xbf16>
    %c0_6 = arith.constant 0 : index
    %c0_7 = arith.constant 0 : index
    %10 = vector.load %arg4[%c0_6, %c0_7] : memref<128x128xbf16, #tpu.memory_space<vmem>>, vector<128x128xbf16>
    %cst_8 = arith.constant dense<0.000000e+00> : vector<512x128xf32>
    %11 = tpu.matmul %9, %10, %cst_8 {dimension_numbers = #tpu.dot_dimension_numbers<[1], [0], [0], [1], [0, 0, 1, 1], [], []>} : vector<512x128xbf16>, vector<128x128xbf16>, vector<512x128xf32> -> vector<512x128xf32>
    %c0_9 = arith.constant 0 : index
    %c0_10 = arith.constant 0 : index
    %12 = vector.load %arg5[%c0_9, %c0_10] : memref<1x128xf32, #tpu.memory_space<vmem>>, vector<1x128xf32>
    %13 = vector.broadcast %12 : vector<1x128xf32> to vector<512x128xf32>
    %14 = arith.addf %11, %13 : vector<512x128xf32>
    %cst_11 = arith.constant 0.000000e+00 : f32
    %15 = vector.broadcast %cst_11 : f32 to vector<512x128xf32>
    %16 = arith.maximumf %14, %15 : vector<512x128xf32>
    %17 = arith.truncf %16 : vector<512x128xf32> to vector<512x128xbf16>
    %c0_12 = arith.constant 0 : index
    %c0_13 = arith.constant 0 : index
    %18 = vector.load %arg6[%c0_12, %c0_13] : memref<128x8xbf16, #tpu.memory_space<vmem>>, vector<128x8xbf16>
    %cst_14 = arith.constant dense<0.000000e+00> : vector<512x8xf32>
    %19 = tpu.matmul %17, %18, %cst_14 {dimension_numbers = #tpu.dot_dimension_numbers<[1], [0], [0], [1], [0, 0, 1, 1], [], []>} : vector<512x128xbf16>, vector<128x8xbf16>, vector<512x8xf32> -> vector<512x8xf32>
    %c0_15 = arith.constant 0 : index
    %c0_16 = arith.constant 0 : index
    %20 = vector.load %arg7[%c0_15, %c0_16] : memref<1x8xf32, #tpu.memory_space<vmem>>, vector<1x8xf32>
    %21 = vector.broadcast %20 : vector<1x8xf32> to vector<512x8xf32>
    %22 = arith.addf %19, %21 : vector<512x8xf32>
    %c0_17 = arith.constant 0 : index
    %c0_18 = arith.constant 0 : index
    %23 = vector.load %arg8[%c0_17, %c0_18] : memref<512x8xf32, #tpu.memory_space<vmem>>, vector<512x8xf32>
    tpu.vector_store %arg8[%c0_17, %c0_18], %22 {strides = array<i32>} : memref<512x8xf32, #tpu.memory_space<vmem>>, vector<512x8xf32>,
    return
  }
  func.func @transform_0(%arg0: i32) -> (i32, i32) {
    %c0_i32 = arith.constant 0 : i32
    %c0_i32_0 = arith.constant 0 : i32
    return %arg0, %c0_i32 : i32, i32
  }
  func.func @transform_1(%arg0: i32) -> (i32, i32) {
    %c0_i32 = arith.constant 0 : i32
    %c0_i32_0 = arith.constant 0 : i32
    %c0_i32_1 = arith.constant 0 : i32
    return %c0_i32, %c0_i32_0 : i32, i32
  }
  func.func @transform_2(%arg0: i32) -> (i32, i32) {
    %c0_i32 = arith.constant 0 : i32
    %c0_i32_0 = arith.constant 0 : i32
    %c0_i32_1 = arith.constant 0 : i32
    return %c0_i32, %c0_i32_0 : i32, i32
  }
  func.func @transform_3(%arg0: i32) -> (i32, i32) {
    %c0_i32 = arith.constant 0 : i32
    %c0_i32_0 = arith.constant 0 : i32
    %c0_i32_1 = arith.constant 0 : i32
    return %c0_i32, %c0_i32_0 : i32, i32
  }
  func.func @transform_4(%arg0: i32) -> (i32, i32) {
    %c0_i32 = arith.constant 0 : i32
    %c0_i32_0 = arith.constant 0 : i32
    %c0_i32_1 = arith.constant 0 : i32
    return %c0_i32, %c0_i32_0 : i32, i32
  }
  func.func @transform_5(%arg0: i32) -> (i32, i32) {
    %c0_i32 = arith.constant 0 : i32
    %c0_i32_0 = arith.constant 0 : i32
    %c0_i32_1 = arith.constant 0 : i32
    return %c0_i32, %c0_i32_0 : i32, i32
  }
  func.func @transform_6(%arg0: i32) -> (i32, i32) {
    %c0_i32 = arith.constant 0 : i32
    %c0_i32_0 = arith.constant 0 : i32
    %c0_i32_1 = arith.constant 0 : i32
    return %c0_i32, %c0_i32_0 : i32, i32
  }
  func.func @transform_7(%arg0: i32) -> (i32, i32) {
    %c0_i32 = arith.constant 0 : i32
    %c0_i32_0 = arith.constant 0 : i32
    return %arg0, %c0_i32 : i32, i32
  }
}

</mosaic_0001>

<llo_original>
// kernel: _dqn_pallas.1
$region0: #{_dqn_pallas.1}
  #allocation0 [shape = 'u32[]', space=smem, size = 0x4, offset = 0x4, fixed_abs, tag = 'smem constant byte address 0x4 - core index']
  #allocation1 [shape = 'u32[72,128]{1,0:T(1,128)}', space=vmem, size = 0x9000, scoped, tag = 'internal scratch']
  %s0 = inlined_call_operand.vmem [shape: f32[512,32], index: 0, kind: input, shape index: {}]
  %s1 = inlined_call_operand.vmem [shape: bf16[32,128], index: 1, kind: input, shape index: {}]
  %s2 = inlined_call_operand.vmem [shape: f32[1,128], index: 2, kind: input, shape index: {}]
  %s3 = inlined_call_operand.vmem [shape: bf16[128,128], index: 3, kind: input, shape index: {}]
  %s4 = inlined_call_operand.vmem [shape: f32[1,128], index: 4, kind: input, shape index: {}]
  %s5 = inlined_call_operand.vmem [shape: bf16[128,8], index: 5, kind: input, shape index: {}]
  %s6 = inlined_call_operand.vmem [shape: f32[1,8], index: 6, kind: input, shape index: {}]
  %s7 = inlined_call_operand.vmem [shape: f32[512,8], index: 7, kind: output, shape index: {}]
  %s8 = sld [smem:[#allocation0]]
  $region38: #{_dqn_pallas.1} parent=0
    _
  %s10 = ssub.s32 1, %s8
  %s11 = scalar_select 0, %s10, %s8
  // Predicated region
  $region2: #{_dqn_pallas.1} parent=0 // pred_check
    _
  $region3: #{_dqn_pallas.1} parent=0 // pred_check_branch
    %13 = sbr.rel (0) target = $region5
  $region4: #{_dqn_pallas.1} parent=0 // pred_region
    _
  $region5: #{_dqn_pallas.1} parent=0 // pred_fallthru
    _
  // Predicated region
  $region6: #{_dqn_pallas.1} parent=0 // pred_check
    _
  $region7: #{_dqn_pallas.1} parent=0 // pred_check_branch
    %15 = sbr.rel (0) target = $region9
  $region8: #{_dqn_pallas.1} parent=0 // pred_region
    _
  $region9: #{_dqn_pallas.1} parent=0 // pred_fallthru
    _
  // Predicated region
  $region10: #{_dqn_pallas.1} parent=0 // pred_check
    _
  $region11: #{_dqn_pallas.1} parent=0 // pred_check_branch
    %17 = sbr.rel (0) target = $region13
  $region12: #{_dqn_pallas.1} parent=0 // pred_region
    _
  $region13: #{_dqn_pallas.1} parent=0 // pred_fallthru
    _
  // Predicated region
  $region14: #{_dqn_pallas.1} parent=0 // pred_check
    _
  $region15: #{_dqn_pallas.1} parent=0 // pred_check_branch
    %19 = sbr.rel (0) target = $region17
  $region16: #{_dqn_pallas.1} parent=0 // pred_region
    _
  $region17: #{_dqn_pallas.1} parent=0 // pred_fallthru
    _
  // Predicated region
  $region18: #{_dqn_pallas.1} parent=0 // pred_check
    _
  $region19: #{_dqn_pallas.1} parent=0 // pred_check_branch
    %21 = sbr.rel (0) target = $region21
  $region20: #{_dqn_pallas.1} parent=0 // pred_region
    _
  $region21: #{_dqn_pallas.1} parent=0 // pred_fallthru
    _
  // Predicated region
  $region22: #{_dqn_pallas.1} parent=0 // pred_check
    _
  $region23: #{_dqn_pallas.1} parent=0 // pred_check_branch
    %23 = sbr.rel (0) target = $region25
  $region24: #{_dqn_pallas.1} parent=0 // pred_region
    _
  $region25: #{_dqn_pallas.1} parent=0 // pred_fallthru
    _
  // Predicated region
  $region26: #{_dqn_pallas.1} parent=0 // pred_check
    _
  $region27: #{_dqn_pallas.1} parent=0 // pred_check_branch
    %25 = sbr.rel (0) target = $region29
  $region28: #{_dqn_pallas.1} parent=0 // pred_region
    _
  $region29: #{_dqn_pallas.1} parent=0 // pred_fallthru
    _
  %v27 = vld [vmem:[%s0] sm:$0xff]
  %v28 = vld [vmem:[%s0 + $0x8] sm:$0xff]
  %v29 = vld [vmem:[%s0 + $0x10] sm:$0xff]
  %v30 = vld [vmem:[%s0 + $0x18] sm:$0xff]
  %v31 = vld [vmem:[%s0 + $0x20] sm:$0xff]
  %v32 = vld [vmem:[%s0 + $0x28] sm:$0xff]
  %v33 = vld [vmem:[%s0 + $0x30] sm:$0xff]
  %v34 = vld [vmem:[%s0 + $0x38] sm:$0xff]
  %v35 = vld [vmem:[%s0 + $0x40] sm:$0xff]
  %v36 = vld [vmem:[%s0 + $0x48] sm:$0xff]
  %v37 = vld [vmem:[%s0 + $0x50] sm:$0xff]
  %v38 = vld [vmem:[%s0 + $0x58] sm:$0xff]
  %v39 = vld [vmem:[%s0 + $0x60] sm:$0xff]
  %v40 = vld [vmem:[%s0 + $0x68] sm:$0xff]
  %v41 = vld [vmem:[%s0 + $0x70] sm:$0xff]
  %v42 = vld [vmem:[%s0 + $0x78] sm:$0xff]
  %v43 = vld [vmem:[%s0 + $0x80] sm:$0xff]
  %v44 = vld [vmem:[%s0 + $0x88] sm:$0xff]
  %v45 = vld [vmem:[%s0 + $0x90] sm:$0xff]
  %v46 = vld [vmem:[%s0 + $0x98] sm:$0xff]
  %v47 = vld [vmem:[%s0 + $0xa0] sm:$0xff]
  %v48 = vld [vmem:[%s0 + $0xa8] sm:$0xff]
  %v49 = vld [vmem:[%s0 + $0xb0] sm:$0xff]
  %v50 = vld [vmem:[%s0 + $0xb8] sm:$0xff]
  %v51 = vld [vmem:[%s0 + $0xc0] sm:$0xff]
  %v52 = vld [vmem:[%s0 + $0xc8] sm:$0xff]
  %v53 = vld [vmem:[%s0 + $0xd0] sm:$0xff]
  %v54 = vld [vmem:[%s0 + $0xd8] sm:$0xff]
  %v55 = vld [vmem:[%s0 + $0xe0] sm:$0xff]
  %v56 = vld [vmem:[%s0 + $0xe8] sm:$0xff]
  %v57 = vld [vmem:[%s0 + $0xf0] sm:$0xff]
  %v58 = vld [vmem:[%s0 + $0xf8] sm:$0xff]
  %v59 = vld [vmem:[%s0 + $0x100] sm:$0xff]
  %v60 = vld [vmem:[%s0 + $0x108] sm:$0xff]
  %v61 = vld [vmem:[%s0 + $0x110] sm:$0xff]
  %v62 = vld [vmem:[%s0 + $0x118] sm:$0xff]
  %v63 = vld [vmem:[%s0 + $0x120] sm:$0xff]
  %v64 = vld [vmem:[%s0 + $0x128] sm:$0xff]
  %v65 = vld [vmem:[%s0 + $0x130] sm:$0xff]
  %v66 = vld [vmem:[%s0 + $0x138] sm:$0xff]
  %v67 = vld [vmem:[%s0 + $0x140] sm:$0xff]
  %v68 = vld [vmem:[%s0 + $0x148] sm:$0xff]
  %v69 = vld [vmem:[%s0 + $0x150] sm:$0xff]
  %v70 = vld [vmem:[%s0 + $0x158] sm:$0xff]
  %v71 = vld [vmem:[%s0 + $0x160] sm:$0xff]
  %v72 = vld [vmem:[%s0 + $0x168] sm:$0xff]
  %v73 = vld [vmem:[%s0 + $0x170] sm:$0xff]
  %v74 = vld [vmem:[%s0 + $0x178] sm:$0xff]
  %v75 = vld [vmem:[%s0 + $0x180] sm:$0xff]
  %v76 = vld [vmem:[%s0 + $0x188] sm:$0xff]
  %v77 = vld [vmem:[%s0 + $0x190] sm:$0xff]
  %v78 = vld [vmem:[%s0 + $0x198] sm:$0xff]
  %v79 = vld [vmem:[%s0 + $0x1a0] sm:$0xff]
  %v80 = vld [vmem:[%s0 + $0x1a8] sm:$0xff]
  %v81 = vld [vmem:[%s0 + $0x1b0] sm:$0xff]
  %v82 = vld [vmem:[%s0 + $0x1b8] sm:$0xff]
  %v83 = vld [vmem:[%s0 + $0x1c0] sm:$0xff]
  %v84 = vld [vmem:[%s0 + $0x1c8] sm:$0xff]
  %v85 = vld [vmem:[%s0 + $0x1d0] sm:$0xff]
  %v86 = vld [vmem:[%s0 + $0x1d8] sm:$0xff]
  %v87 = vld [vmem:[%s0 + $0x1e0] sm:$0xff]
  %v88 = vld [vmem:[%s0 + $0x1e8] sm:$0xff]
  %v89 = vld [vmem:[%s0 + $0x1f0] sm:$0xff]
  %v90 = vld [vmem:[%s0 + $0x1f8] sm:$0xff]
  %v91 = vpack.c.bf16 %v28, %v27
  %v92 = vpack.c.bf16 %v30, %v29
  %v93 = vpack.c.bf16 %v32, %v31
  %v94 = vpack.c.bf16 %v34, %v33
  %v95 = vpack.c.bf16 %v36, %v35
  %v96 = vpack.c.bf16 %v38, %v37
  %v97 = vpack.c.bf16 %v40, %v39
  %v98 = vpack.c.bf16 %v42, %v41
  %v99 = vpack.c.bf16 %v44, %v43
  %v100 = vpack.c.bf16 %v46, %v45
  %v101 = vpack.c.bf16 %v48, %v47
  %v102 = vpack.c.bf16 %v50, %v49
  %v103 = vpack.c.bf16 %v52, %v51
  %v104 = vpack.c.bf16 %v54, %v53
  %v105 = vpack.c.bf16 %v56, %v55
  %v106 = vpack.c.bf16 %v58, %v57
  %v107 = vpack.c.bf16 %v60, %v59
  %v108 = vpack.c.bf16 %v62, %v61
  %v109 = vpack.c.bf16 %v64, %v63
  %v110 = vpack.c.bf16 %v66, %v65
  %v111 = vpack.c.bf16 %v68, %v67
  %v112 = vpack.c.bf16 %v70, %v69
  %v113 = vpack.c.bf16 %v72, %v71
  %v114 = vpack.c.bf16 %v74, %v73
  %v115 = vpack.c.bf16 %v76, %v75
  %v116 = vpack.c.bf16 %v78, %v77
  %v117 = vpack.c.bf16 %v80, %v79
  %v118 = vpack.c.bf16 %v82, %v81
  %v119 = vpack.c.bf16 %v84, %v83
  %v120 = vpack.c.bf16 %v86, %v85
  %v121 = vpack.c.bf16 %v88, %v87
  %v122 = vpack.c.bf16 %v90, %v89
  %v123 = vld [vmem:[%s1] sm:$0xf]
  %v124 = vld [vmem:[%s1 + $0x4] sm:$0xf]
  %v125 = vld [vmem:[%s1 + $0x8] sm:$0xf]
  %v126 = vld [vmem:[%s1 + $0xc] sm:$0xf]
  %v127 = vld [vmem:[%s2] sm:$0x1]
  %v129 = vperm.slane %v127, 0
  %v135 = vunpack.c.l.b16 %v123
  %v136 = vunpack.c.l.b16 %v124
  %v137 = vunpack.c.l.b16 %v125
  %v138 = vunpack.c.l.b16 %v126
  %v139 = vpack.c.b16 %v136, %v135
  %v140 = vpack.c.b16 %v138, %v137
  %vm143 = vcmask 261120
  %v145 = vsel %vm143, %v91, 0
  %v148 = vsel %vm143, %v92, 0
  %v151 = vsel %vm143, %v93, 0
  %v154 = vsel %vm143, %v94, 0
  %v157 = vsel %vm143, %v95, 0
  %v160 = vsel %vm143, %v96, 0
  %v163 = vsel %vm143, %v97, 0
  %v166 = vsel %vm143, %v98, 0
  %v169 = vsel %vm143, %v99, 0
  %v172 = vsel %vm143, %v100, 0
  %v175 = vsel %vm143, %v101, 0
  %v178 = vsel %vm143, %v102, 0
  %v181 = vsel %vm143, %v103, 0
  %v184 = vsel %vm143, %v104, 0
  %v187 = vsel %vm143, %v105, 0
  %v190 = vsel %vm143, %v106, 0
  %v193 = vsel %vm143, %v107, 0
  %v196 = vsel %vm143, %v108, 0
  %v199 = vsel %vm143, %v109, 0
  %v202 = vsel %vm143, %v110, 0
  %v205 = vsel %vm143, %v111, 0
  %v208 = vsel %vm143, %v112, 0
  %v211 = vsel %vm143, %v113, 0
  %v214 = vsel %vm143, %v114, 0
  %v217 = vsel %vm143, %v115, 0
  %v220 = vsel %vm143, %v116, 0
  %v223 = vsel %vm143, %v117, 0
  %v226 = vsel %vm143, %v118, 0
  %v229 = vsel %vm143, %v119, 0
  %v232 = vsel %vm143, %v120, 0
  %v235 = vsel %vm143, %v121, 0
  %v238 = vsel %vm143, %v122, 0
  %240 = vmatpush.bf16.msra.mxu0 0
  %241 = vmatpush.bf16.msra.mxu0 0
  %242 = vmatpush.bf16.msra.mxu0 0
  %243 = vmatpush.bf16.msra.mxu0 0
  %244 = vmatpush.bf16.msra.mxu0 0
  %245 = vmatpush.bf16.msra.mxu0 0
  %246 = vmatpush.bf16.msra.mxu0 %v140
  %247 = vmatpush.bf16.msra.mxu0 %v139
  %248 = vmatmul.bf16.gmra.mxu0 %v145
  %v249 = vpop.f32.mrf.mxu0
  %v250 = vadd.f32 %v129, %v249
  %v251 = vpop.f32.mrf.mxu0
  %v252 = vadd.f32 %v129, %v251
  %253 = vmatmul.bf16.gmra.mxu0 %v148
  %v254 = vpop.f32.mrf.mxu0
  %v255 = vadd.f32 %v129, %v254
  %v256 = vpop.f32.mrf.mxu0
  %v257 = vadd.f32 %v129, %v256
  %258 = vmatmul.bf16.gmra.mxu0 %v151
  %v259 = vpop.f32.mrf.mxu0
  %v260 = vadd.f32 %v129, %v259
  %v261 = vpop.f32.mrf.mxu0
  %v262 = vadd.f32 %v129, %v261
  %263 = vmatmul.bf16.gmra.mxu0 %v154
  %v264 = vpop.f32.mrf.mxu0
  %v265 = vadd.f32 %v129, %v264
  %v266 = vpop.f32.mrf.mxu0
  %v267 = vadd.f32 %v129, %v266
  %268 = vmatmul.bf16.gmra.mxu0 %v157
  %v269 = vpop.f32.mrf.mxu0
  %v270 = vadd.f32 %v129, %v269
  %v271 = vpop.f32.mrf.mxu0
  %v272 = vadd.f32 %v129, %v271
  %273 = vmatmul.bf16.gmra.mxu0 %v160
  %v274 = vpop.f32.mrf.mxu0
  %v275 = vadd.f32 %v129, %v274
  %v276 = vpop.f32.mrf.mxu0
  %v277 = vadd.f32 %v129, %v276
  %278 = vmatmul.bf16.gmra.mxu0 %v163
  %v279 = vpop.f32.mrf.mxu0
  %v280 = vadd.f32 %v129, %v279
  %v281 = vpop.f32.mrf.mxu0
  %v282 = vadd.f32 %v129, %v281
  %283 = vmatmul.bf16.gmra.mxu0 %v166
  %v284 = vpop.f32.mrf.mxu0
  %v285 = vadd.f32 %v129, %v284
  %v286 = vpop.f32.mrf.mxu0
  %v287 = vadd.f32 %v129, %v286
  %288 = vmatmul.bf16.gmra.mxu0 %v169
  %v289 = vpop.f32.mrf.mxu0
  %v290 = vadd.f32 %v129, %v289
  %v291 = vpop.f32.mrf.mxu0
  %v292 = vadd.f32 %v129, %v291
  %293 = vmatmul.bf16.gmra.mxu0 %v172
  %v294 = vpop.f32.mrf.mxu0
  %v295 = vadd.f32 %v129, %v294
  %v296 = vpop.f32.mrf.mxu0
  %v297 = vadd.f32 %v129, %v296
  %298 = vmatmul.bf16.gmra.mxu0 %v175
  %v299 = vpop.f32.mrf.mxu0
  %v300 = vadd.f32 %v129, %v299
  %v301 = vpop.f32.mrf.mxu0
  %v302 = vadd.f32 %v129, %v301
  %303 = vmatmul.bf16.gmra.mxu0 %v178
  %v304 = vpop.f32.mrf.mxu0
  %v305 = vadd.f32 %v129, %v304
  %v306 = vpop.f32.mrf.mxu0
  %v307 = vadd.f32 %v129, %v306
  %308 = vmatmul.bf16.gmra.mxu0 %v181
  %v309 = vpop.f32.mrf.mxu0
  %v310 = vadd.f32 %v129, %v309
  %v311 = vpop.f32.mrf.mxu0
  %v312 = vadd.f32 %v129, %v311
  %313 = vmatmul.bf16.gmra.mxu0 %v184
  %v314 = vpop.f32.mrf.mxu0
  %v315 = vadd.f32 %v129, %v314
  %v316 = vpop.f32.mrf.mxu0
  %v317 = vadd.f32 %v129, %v316
  %318 = vmatmul.bf16.gmra.mxu0 %v187
  %v319 = vpop.f32.mrf.mxu0
  %v320 = vadd.f32 %v129, %v319
  %v321 = vpop.f32.mrf.mxu0
  %v322 = vadd.f32 %v129, %v321
  %323 = vmatmul.bf16.gmra.mxu0 %v190
  %v324 = vpop.f32.mrf.mxu0
  %v325 = vadd.f32 %v129, %v324
  %v326 = vpop.f32.mrf.mxu0
  %v327 = vadd.f32 %v129, %v326
  %328 = vmatmul.bf16.gmra.mxu0 %v193
  %v329 = vpop.f32.mrf.mxu0
  %v330 = vadd.f32 %v129, %v329
  %v331 = vpop.f32.mrf.mxu0
  %v332 = vadd.f32 %v129, %v331
  %333 = vmatmul.bf16.gmra.mxu0 %v196
  %v334 = vpop.f32.mrf.mxu0
  %v335 = vadd.f32 %v129, %v334
  %v336 = vpop.f32.mrf.mxu0
  %v337 = vadd.f32 %v129, %v336
  %338 = vmatmul.bf16.gmra.mxu0 %v199
  %v339 = vpop.f32.mrf.mxu0
  %v340 = vadd.f32 %v129, %v339
  %v341 = vpop.f32.mrf.mxu0
  %v342 = vadd.f32 %v129, %v341
  %343 = vmatmul.bf16.gmra.mxu0 %v202
  %v344 = vpop.f32.mrf.mxu0
  %v345 = vadd.f32 %v129, %v344
  %v346 = vpop.f32.mrf.mxu0
  %v347 = vadd.f32 %v129, %v346
  %348 = vmatmul.bf16.gmra.mxu0 %v205
  %v349 = vpop.f32.mrf.mxu0
  %v350 = vadd.f32 %v129, %v349
  %v351 = vpop.f32.mrf.mxu0
  %v352 = vadd.f32 %v129, %v351
  %353 = vmatmul.bf16.gmra.mxu0 %v208
  %v354 = vpop.f32.mrf.mxu0
  %v355 = vadd.f32 %v129, %v354
  %v356 = vpop.f32.mrf.mxu0
  %v357 = vadd.f32 %v129, %v356
  %358 = vmatmul.bf16.gmra.mxu0 %v211
  %v359 = vpop.f32.mrf.mxu0
  %v360 = vadd.f32 %v129, %v359
  %v361 = vpop.f32.mrf.mxu0
  %v362 = vadd.f32 %v129, %v361
  %363 = vmatmul.bf16.gmra.mxu0 %v214
  %v364 = vpop.f32.mrf.mxu0
  %v365 = vadd.f32 %v129, %v364
  %v366 = vpop.f32.mrf.mxu0
  %v367 = vadd.f32 %v129, %v366
  %368 = vmatmul.bf16.gmra.mxu0 %v217
  %v369 = vpop.f32.mrf.mxu0
  %v370 = vadd.f32 %v129, %v369
  %v371 = vpop.f32.mrf.mxu0
  %v372 = vadd.f32 %v129, %v371
  %373 = vmatmul.bf16.gmra.mxu0 %v220
  %v374 = vpop.f32.mrf.mxu0
  %v375 = vadd.f32 %v129, %v374
  %v376 = vpop.f32.mrf.mxu0
  %v377 = vadd.f32 %v129, %v376
  %378 = vmatmul.bf16.gmra.mxu0 %v223
  %v379 = vpop.f32.mrf.mxu0
  %v380 = vadd.f32 %v129, %v379
  %v381 = vpop.f32.mrf.mxu0
  %v382 = vadd.f32 %v129, %v381
  %383 = vmatmul.bf16.gmra.mxu0 %v226
  %v384 = vpop.f32.mrf.mxu0
  %v385 = vadd.f32 %v129, %v384
  %v386 = vpop.f32.mrf.mxu0
  %v387 = vadd.f32 %v129, %v386
  %388 = vmatmul.bf16.gmra.mxu0 %v229
  %v389 = vpop.f32.mrf.mxu0
  %v390 = vadd.f32 %v129, %v389
  %v391 = vpop.f32.mrf.mxu0
  %v392 = vadd.f32 %v129, %v391
  %393 = vmatmul.bf16.gmra.mxu0 %v232
  %v394 = vpop.f32.mrf.mxu0
  %v395 = vadd.f32 %v129, %v394
  %v396 = vpop.f32.mrf.mxu0
  %v397 = vadd.f32 %v129, %v396
  %398 = vmatmul.bf16.gmra.mxu0 %v235
  %v399 = vpop.f32.mrf.mxu0
  %v400 = vadd.f32 %v129, %v399
  %v401 = vpop.f32.mrf.mxu0
  %v402 = vadd.f32 %v129, %v401
  %403 = vmatmul.bf16.gmra.mxu0 %v238
  %v404 = vpop.f32.mrf.mxu0
  %v405 = vadd.f32 %v129, %v404
  %v406 = vpop.f32.mrf.mxu0
  %v407 = vadd.f32 %v129, %v406
  %408 = vdwg.mxu0
  %v409 = vmax.f32 %v250, 0.0
  %v410 = vmax.f32 %v252, 0.0
  %v411 = vmax.f32 %v255, 0.0
  %v412 = vmax.f32 %v257, 0.0
  %v413 = vmax.f32 %v260, 0.0
  %v414 = vmax.f32 %v262, 0.0
  %v415 = vmax.f32 %v265, 0.0
  %v416 = vmax.f32 %v267, 0.0
  %v417 = vmax.f32 %v270, 0.0
  %v418 = vmax.f32 %v272, 0.0
  %v419 = vmax.f32 %v275, 0.0
  %v420 = vmax.f32 %v277, 0.0
  %v421 = vmax.f32 %v280, 0.0
  %v422 = vmax.f32 %v282, 0.0
  %v423 = vmax.f32 %v285, 0.0
  %v424 = vmax.f32 %v287, 0.0
  %v425 = vmax.f32 %v290, 0.0
  %v426 = vmax.f32 %v292, 0.0
  %v427 = vmax.f32 %v295, 0.0
  %v428 = vmax.f32 %v297, 0.0
  %v429 = vmax.f32 %v300, 0.0
  %v430 = vmax.f32 %v302, 0.0
  %v431 = vmax.f32 %v305, 0.0
  %v432 = vmax.f32 %v307, 0.0
  %v433 = vmax.f32 %v310, 0.0
  %v434 = vmax.f32 %v312, 0.0
  %v435 = vmax.f32 %v315, 0.0
  %v436 = vmax.f32 %v317, 0.0
  %v437 = vmax.f32 %v320, 0.0
  %v438 = vmax.f32 %v322, 0.0
  %v439 = vmax.f32 %v325, 0.0
  %v440 = vmax.f32 %v327, 0.0
  %v441 = vmax.f32 %v330, 0.0
  %v442 = vmax.f32 %v332, 0.0
  %v443 = vmax.f32 %v335, 0.0
  %v444 = vmax.f32 %v337, 0.0
  %v445 = vmax.f32 %v340, 0.0
  %v446 = vmax.f32 %v342, 0.0
  %v447 = vmax.f32 %v345, 0.0
  %v448 = vmax.f32 %v347, 0.0
  %v449 = vmax.f32 %v350, 0.0
  %v450 = vmax.f32 %v352, 0.0
  %v451 = vmax.f32 %v355, 0.0
  %v452 = vmax.f32 %v357, 0.0
  %v453 = vmax.f32 %v360, 0.0
  %v454 = vmax.f32 %v362, 0.0
  %v455 = vmax.f32 %v365, 0.0
  %v456 = vmax.f32 %v367, 0.0
  %v457 = vmax.f32 %v370, 0.0
  %v458 = vmax.f32 %v372, 0.0
  %v459 = vmax.f32 %v375, 0.0
  %v460 = vmax.f32 %v377, 0.0
  %v461 = vmax.f32 %v380, 0.0
  %v462 = vmax.f32 %v382, 0.0
  %v463 = vmax.f32 %v385, 0.0
  %v464 = vmax.f32 %v387, 0.0
  %v465 = vmax.f32 %v390, 0.0
  %v466 = vmax.f32 %v392, 0.0
  %v467 = vmax.f32 %v395, 0.0
  %v468 = vmax.f32 %v397, 0.0
  %v469 = vmax.f32 %v400, 0.0
  %v470 = vmax.f32 %v402, 0.0
  %v471 = vmax.f32 %v405, 0.0
  %v472 = vmax.f32 %v407, 0.0
  %v473 = vpack.c.bf16 %v410, %v409
  %v474 = vpack.c.bf16 %v412, %v411
  %v475 = vpack.c.bf16 %v414, %v413
  %v476 = vpack.c.bf16 %v416, %v415
  %v477 = vpack.c.bf16 %v418, %v417
  %v478 = vpack.c.bf16 %v420, %v419
  %v479 = vpack.c.bf16 %v422, %v421
  %v480 = vpack.c.bf16 %v424, %v423
  %v481 = vpack.c.bf16 %v426, %v425
  %v482 = vpack.c.bf16 %v428, %v427
  %v483 = vpack.c.bf16 %v430, %v429
  %v484 = vpack.c.bf16 %v432, %v431
  %v485 = vpack.c.bf16 %v434, %v433
  %v486 = vpack.c.bf16 %v436, %v435
  %v487 = vpack.c.bf16 %v438, %v437
  %v488 = vpack.c.bf16 %v440, %v439
  %v489 = vpack.c.bf16 %v442, %v441
  %v490 = vpack.c.bf16 %v444, %v443
  %v491 = vpack.c.bf16 %v446, %v445
  %v492 = vpack.c.bf16 %v448, %v447
  %v493 = vpack.c.bf16 %v450, %v449
  %v494 = vpack.c.bf16 %v452, %v451
  %v495 = vpack.c.bf16 %v454, %v453
  %v496 = vpack.c.bf16 %v456, %v455
  %v497 = vpack.c.bf16 %v458, %v457
  %v498 = vpack.c.bf16 %v460, %v459
  %v499 = vpack.c.bf16 %v462, %v461
  %v500 = vpack.c.bf16 %v464, %v463
  %v501 = vpack.c.bf16 %v466, %v465
  %v502 = vpack.c.bf16 %v468, %v467
  %v503 = vpack.c.bf16 %v470, %v469
  %v504 = vpack.c.bf16 %v472, %v471
  %v505 = vld [vmem:[%s3] sm:$0xf]
  %v506 = vld [vmem:[%s3 + $0x4] sm:$0xf]
  %v507 = vld [vmem:[%s3 + $0x8] sm:$0xf]
  %v508 = vld [vmem:[%s3 + $0xc] sm:$0xf]
  %v509 = vld [vmem:[%s3 + $0x10] sm:$0xf]
  %v510 = vld [vmem:[%s3 + $0x14] sm:$0xf]
  %v511 = vld [vmem:[%s3 + $0x18] sm:$0xf]
  %v512 = vld [vmem:[%s3 + $0x1c] sm:$0xf]
  %v513 = vld [vmem:[%s3 + $0x20] sm:$0xf]
  %v514 = vld [vmem:[%s3 + $0x24] sm:$0xf]
  %v515 = vld [vmem:[%s3 + $0x28] sm:$0xf]
  %v516 = vld [vmem:[%s3 + $0x2c] sm:$0xf]
  %v517 = vld [vmem:[%s3 + $0x30] sm:$0xf]
  %v518 = vld [vmem:[%s3 + $0x34] sm:$0xf]
  %v519 = vld [vmem:[%s3 + $0x38] sm:$0xf]
  %v520 = vld [vmem:[%s3 + $0x3c] sm:$0xf]
  %v521 = vld [vmem:[%s4] sm:$0x1]
  %v523 = vperm.slane %v521, 0
  %v541 = vunpack.c.l.b16 %v505
  %v542 = vunpack.c.l.b16 %v506
  %v543 = vunpack.c.l.b16 %v507
  %v544 = vunpack.c.l.b16 %v508
  %v545 = vunpack.c.l.b16 %v509
  %v546 = vunpack.c.l.b16 %v510
  %v547 = vunpack.c.l.b16 %v511
  %v548 = vunpack.c.l.b16 %v512
  %v549 = vunpack.c.l.b16 %v513
  %v550 = vunpack.c.l.b16 %v514
  %v551 = vunpack.c.l.b16 %v515
  %v552 = vunpack.c.l.b16 %v516
  %v553 = vunpack.c.l.b16 %v517
  %v554 = vunpack.c.l.b16 %v518
  %v555 = vunpack.c.l.b16 %v519
  %v556 = vunpack.c.l.b16 %v520
  %v557 = vpack.c.b16 %v542, %v541
  %v558 = vpack.c.b16 %v544, %v543
  %v559 = vpack.c.b16 %v546, %v545
  %v560 = vpack.c.b16 %v548, %v547
  %v561 = vpack.c.b16 %v550, %v549
  %v562 = vpack.c.b16 %v552, %v551
  %v563 = vpack.c.b16 %v554, %v553
  %v564 = vpack.c.b16 %v556, %v555
  %573 = vmatpush.bf16.msra.mxu0 %v564
  %574 = vmatpush.bf16.msra.mxu0 %v563
  %575 = vmatpush.bf16.msra.mxu0 %v562
  %576 = vmatpush.bf16.msra.mxu0 %v561
  %577 = vmatpush.bf16.msra.mxu0 %v560
  %578 = vmatpush.bf16.msra.mxu0 %v559
  %579 = vmatpush.bf16.msra.mxu0 %v558
  %580 = vmatpush.bf16.msra.mxu0 %v557
  %581 = vmatmul.bf16.gmra.mxu0 %v473
  %v582 = vpop.f32.mrf.mxu0
  %v583 = vadd.f32 %v523, %v582
  %v584 = vpop.f32.mrf.mxu0
  %v585 = vadd.f32 %v523, %v584
  %586 = vmatmul.bf16.gmra.mxu0 %v474
  %v587 = vpop.f32.mrf.mxu0
  %v588 = vadd.f32 %v523, %v587
  %v589 = vpop.f32.mrf.mxu0
  %v590 = vadd.f32 %v523, %v589
  %591 = vmatmul.bf16.gmra.mxu0 %v475
  %v592 = vpop.f32.mrf.mxu0
  %v593 = vadd.f32 %v523, %v592
  %v594 = vpop.f32.mrf.mxu0
  %v595 = vadd.f32 %v523, %v594
  %596 = vmatmul.bf16.gmra.mxu0 %v476
  %v597 = vpop.f32.mrf.mxu0
  %v598 = vadd.f32 %v523, %v597
  %v599 = vpop.f32.mrf.mxu0
  %v600 = vadd.f32 %v523, %v599
  %601 = vmatmul.bf16.gmra.mxu0 %v477
  %v602 = vpop.f32.mrf.mxu0
  %v603 = vadd.f32 %v523, %v602
  %v604 = vpop.f32.mrf.mxu0
  %v605 = vadd.f32 %v523, %v604
  %606 = vmatmul.bf16.gmra.mxu0 %v478
  %v607 = vpop.f32.mrf.mxu0
  %v608 = vadd.f32 %v523, %v607
  %v609 = vpop.f32.mrf.mxu0
  %v610 = vadd.f32 %v523, %v609
  %611 = vmatmul.bf16.gmra.mxu0 %v479
  %v612 = vpop.f32.mrf.mxu0
  %v613 = vadd.f32 %v523, %v612
  %v614 = vpop.f32.mrf.mxu0
  %v615 = vadd.f32 %v523, %v614
  %616 = vmatmul.bf16.gmra.mxu0 %v480
  %v617 = vpop.f32.mrf.mxu0
  %v618 = vadd.f32 %v523, %v617
  %v619 = vpop.f32.mrf.mxu0
  %v620 = vadd.f32 %v523, %v619
  %621 = vmatmul.bf16.gmra.mxu0 %v481
  %v622 = vpop.f32.mrf.mxu0
  %v623 = vadd.f32 %v523, %v622
  %v624 = vpop.f32.mrf.mxu0
  %v625 = vadd.f32 %v523, %v624
  %626 = vmatmul.bf16.gmra.mxu0 %v482
  %v627 = vpop.f32.mrf.mxu0
  %v628 = vadd.f32 %v523, %v627
  %v629 = vpop.f32.mrf.mxu0
  %v630 = vadd.f32 %v523, %v629
  %631 = vmatmul.bf16.gmra.mxu0 %v483
  %v632 = vpop.f32.mrf.mxu0
  %v633 = vadd.f32 %v523, %v632
  %v634 = vpop.f32.mrf.mxu0
  %v635 = vadd.f32 %v523, %v634
  %636 = vmatmul.bf16.gmra.mxu0 %v484
  %v637 = vpop.f32.mrf.mxu0
  %v638 = vadd.f32 %v523, %v637
  %v639 = vpop.f32.mrf.mxu0
  %v640 = vadd.f32 %v523, %v639
  %641 = vmatmul.bf16.gmra.mxu0 %v485
  %v642 = vpop.f32.mrf.mxu0
  %v643 = vadd.f32 %v523, %v642
  %v644 = vpop.f32.mrf.mxu0
  %v645 = vadd.f32 %v523, %v644
  %646 = vmatmul.bf16.gmra.mxu0 %v486
  %v647 = vpop.f32.mrf.mxu0
  %v648 = vadd.f32 %v523, %v647
  %v649 = vpop.f32.mrf.mxu0
  %v650 = vadd.f32 %v523, %v649
  %651 = vmatmul.bf16.gmra.mxu0 %v487
  %v652 = vpop.f32.mrf.mxu0
  %v653 = vadd.f32 %v523, %v652
  %v654 = vpop.f32.mrf.mxu0
  %v655 = vadd.f32 %v523, %v654
  %656 = vmatmul.bf16.gmra.mxu0 %v488
  %v657 = vpop.f32.mrf.mxu0
  %v658 = vadd.f32 %v523, %v657
  %v659 = vpop.f32.mrf.mxu0
  %v660 = vadd.f32 %v523, %v659
  %661 = vmatmul.bf16.gmra.mxu0 %v489
  %v662 = vpop.f32.mrf.mxu0
  %v663 = vadd.f32 %v523, %v662
  %v664 = vpop.f32.mrf.mxu0
  %v665 = vadd.f32 %v523, %v664
  %666 = vmatmul.bf16.gmra.mxu0 %v490
  %v667 = vpop.f32.mrf.mxu0
  %v668 = vadd.f32 %v523, %v667
  %v669 = vpop.f32.mrf.mxu0
  %v670 = vadd.f32 %v523, %v669
  %671 = vmatmul.bf16.gmra.mxu0 %v491
  %v672 = vpop.f32.mrf.mxu0
  %v673 = vadd.f32 %v523, %v672
  %v674 = vpop.f32.mrf.mxu0
  %v675 = vadd.f32 %v523, %v674
  %676 = vmatmul.bf16.gmra.mxu0 %v492
  %v677 = vpop.f32.mrf.mxu0
  %v678 = vadd.f32 %v523, %v677
  %v679 = vpop.f32.mrf.mxu0
  %v680 = vadd.f32 %v523, %v679
  %681 = vmatmul.bf16.gmra.mxu0 %v493
  %v682 = vpop.f32.mrf.mxu0
  %v683 = vadd.f32 %v523, %v682
  %v684 = vpop.f32.mrf.mxu0
  %v685 = vadd.f32 %v523, %v684
  %686 = vmatmul.bf16.gmra.mxu0 %v494
  %v687 = vpop.f32.mrf.mxu0
  %v688 = vadd.f32 %v523, %v687
  %v689 = vpop.f32.mrf.mxu0
  %v690 = vadd.f32 %v523, %v689
  %691 = vmatmul.bf16.gmra.mxu0 %v495
  %v692 = vpop.f32.mrf.mxu0
  %v693 = vadd.f32 %v523, %v692
  %v694 = vpop.f32.mrf.mxu0
  %v695 = vadd.f32 %v523, %v694
  %696 = vmatmul.bf16.gmra.mxu0 %v496
  %v697 = vpop.f32.mrf.mxu0
  %v698 = vadd.f32 %v523, %v697
  %v699 = vpop.f32.mrf.mxu0
  %v700 = vadd.f32 %v523, %v699
  %701 = vmatmul.bf16.gmra.mxu0 %v497
  %v702 = vpop.f32.mrf.mxu0
  %v703 = vadd.f32 %v523, %v702
  %v704 = vpop.f32.mrf.mxu0
  %v705 = vadd.f32 %v523, %v704
  %706 = vmatmul.bf16.gmra.mxu0 %v498
  %v707 = vpop.f32.mrf.mxu0
  %v708 = vadd.f32 %v523, %v707
  %v709 = vpop.f32.mrf.mxu0
  %v710 = vadd.f32 %v523, %v709
  %711 = vmatmul.bf16.gmra.mxu0 %v499
  %v712 = vpop.f32.mrf.mxu0
  %v713 = vadd.f32 %v523, %v712
  %v714 = vpop.f32.mrf.mxu0
  %v715 = vadd.f32 %v523, %v714
  %716 = vmatmul.bf16.gmra.mxu0 %v500
  %v717 = vpop.f32.mrf.mxu0
  %v718 = vadd.f32 %v523, %v717
  %v719 = vpop.f32.mrf.mxu0
  %v720 = vadd.f32 %v523, %v719
  %721 = vmatmul.bf16.gmra.mxu0 %v501
  %v722 = vpop.f32.mrf.mxu0
  %v723 = vadd.f32 %v523, %v722
  %v724 = vpop.f32.mrf.mxu0
  %v725 = vadd.f32 %v523, %v724
  %726 = vmatmul.bf16.gmra.mxu0 %v502
  %v727 = vpop.f32.mrf.mxu0
  %v728 = vadd.f32 %v523, %v727
  %v729 = vpop.f32.mrf.mxu0
  %v730 = vadd.f32 %v523, %v729
  %731 = vmatmul.bf16.gmra.mxu0 %v503
  %v732 = vpop.f32.mrf.mxu0
  %v733 = vadd.f32 %v523, %v732
  %v734 = vpop.f32.mrf.mxu0
  %v735 = vadd.f32 %v523, %v734
  %736 = vmatmul.bf16.gmra.mxu0 %v504
  %v737 = vpop.f32.mrf.mxu0
  %v738 = vadd.f32 %v523, %v737
  %v739 = vpop.f32.mrf.mxu0
  %v740 = vadd.f32 %v523, %v739
  %741 = vdwg.mxu0
  %v742 = vmax.f32 %v583, 0.0
  %v743 = vmax.f32 %v585, 0.0
  %v744 = vmax.f32 %v588, 0.0
  %v745 = vmax.f32 %v590, 0.0
  %v746 = vmax.f32 %v593, 0.0
  %v747 = vmax.f32 %v595, 0.0
  %v748 = vmax.f32 %v598, 0.0
  %v749 = vmax.f32 %v600, 0.0
  %v750 = vmax.f32 %v603, 0.0
  %v751 = vmax.f32 %v605, 0.0
  %v752 = vmax.f32 %v608, 0.0
  %v753 = vmax.f32 %v610, 0.0
  %v754 = vmax.f32 %v613, 0.0
  %v755 = vmax.f32 %v615, 0.0
  %v756 = vmax.f32 %v618, 0.0
  %v757 = vmax.f32 %v620, 0.0
  %v758 = vmax.f32 %v623, 0.0
  %v759 = vmax.f32 %v625, 0.0
  %v760 = vmax.f32 %v628, 0.0
  %v761 = vmax.f32 %v630, 0.0
  %v762 = vmax.f32 %v633, 0.0
  %v763 = vmax.f32 %v635, 0.0
  %v764 = vmax.f32 %v638, 0.0
  %v765 = vmax.f32 %v640, 0.0
  %v766 = vmax.f32 %v643, 0.0
  %v767 = vmax.f32 %v645, 0.0
  %v768 = vmax.f32 %v648, 0.0
  %v769 = vmax.f32 %v650, 0.0
  %v770 = vmax.f32 %v653, 0.0
  %v771 = vmax.f32 %v655, 0.0
  %v772 = vmax.f32 %v658, 0.0
  %v773 = vmax.f32 %v660, 0.0
  %v774 = vmax.f32 %v663, 0.0
  %v775 = vmax.f32 %v665, 0.0
  %v776 = vmax.f32 %v668, 0.0
  %v777 = vmax.f32 %v670, 0.0
  %v778 = vmax.f32 %v673, 0.0
  %v779 = vmax.f32 %v675, 0.0
  %v780 = vmax.f32 %v678, 0.0
  %v781 = vmax.f32 %v680, 0.0
  %v782 = vmax.f32 %v683, 0.0
  %v783 = vmax.f32 %v685, 0.0
  %v784 = vmax.f32 %v688, 0.0
  %v785 = vmax.f32 %v690, 0.0
  %v786 = vmax.f32 %v693, 0.0
  %v787 = vmax.f32 %v695, 0.0
  %v788 = vmax.f32 %v698, 0.0
  %v789 = vmax.f32 %v700, 0.0
  %v790 = vmax.f32 %v703, 0.0
  %v791 = vmax.f32 %v705, 0.0
  %v792 = vmax.f32 %v708, 0.0
  %v793 = vmax.f32 %v710, 0.0
  %v794 = vmax.f32 %v713, 0.0
  %v795 = vmax.f32 %v715, 0.0
  %v796 = vmax.f32 %v718, 0.0
  %v797 = vmax.f32 %v720, 0.0
  %v798 = vmax.f32 %v723, 0.0
  %v799 = vmax.f32 %v725, 0.0
  %v800 = vmax.f32 %v728, 0.0
  %v801 = vmax.f32 %v730, 0.0
  %v802 = vmax.f32 %v733, 0.0
  %v803 = vmax.f32 %v735, 0.0
  %v804 = vmax.f32 %v738, 0.0
  %v805 = vmax.f32 %v740, 0.0
  %v806 = vpack.c.bf16 %v743, %v742
  %v807 = vpack.c.bf16 %v745, %v744
  %v808 = vpack.c.bf16 %v747, %v746
  %v809 = vpack.c.bf16 %v749, %v748
  %v810 = vpack.c.bf16 %v751, %v750
  %v811 = vpack.c.bf16 %v753, %v752
  %v812 = vpack.c.bf16 %v755, %v754
  %v813 = vpack.c.bf16 %v757, %v756
  %v814 = vpack.c.bf16 %v759, %v758
  %v815 = vpack.c.bf16 %v761, %v760
  %v816 = vpack.c.bf16 %v763, %v762
  %v817 = vpack.c.bf16 %v765, %v764
  %v818 = vpack.c.bf16 %v767, %v766
  %v819 = vpack.c.bf16 %v769, %v768
  %v820 = vpack.c.bf16 %v771, %v770
  %v821 = vpack.c.bf16 %v773, %v772
  %v822 = vpack.c.bf16 %v775, %v774
  %v823 = vpack.c.bf16 %v777, %v776
  %v824 = vpack.c.bf16 %v779, %v778
  %v825 = vpack.c.bf16 %v781, %v780
  %v826 = vpack.c.bf16 %v783, %v782
  %v827 = vpack.c.bf16 %v785, %v784
  %v828 = vpack.c.bf16 %v787, %v786
  %v829 = vpack.c.bf16 %v789, %v788
  %v830 = vpack.c.bf16 %v791, %v790
  %v831 = vpack.c.bf16 %v793, %v792
  %v832 = vpack.c.bf16 %v795, %v794
  %v833 = vpack.c.bf16 %v797, %v796
  %v834 = vpack.c.bf16 %v799, %v798
  %v835 = vpack.c.bf16 %v801, %v800
  %v836 = vpack.c.bf16 %v803, %v802
  %v837 = vpack.c.bf16 %v805, %v804
  %v838 = vld [vmem:[%s5] sm:$0xf]
  %v839 = vld [vmem:[%s5 + $0x4] sm:$0xf]
  %v840 = vld [vmem:[%s5 + $0x8] sm:$0xf]
  %v841 = vld [vmem:[%s5 + $0xc] sm:$0xf]
  %v842 = vld [vmem:[%s5 + $0x10] sm:$0xf]
  %v843 = vld [vmem:[%s5 + $0x14] sm:$0xf]
  %v844 = vld [vmem:[%s5 + $0x18] sm:$0xf]
  %v845 = vld [vmem:[%s5 + $0x1c] sm:$0xf]
  %v846 = vld [vmem:[%s5 + $0x20] sm:$0xf]
  %v847 = vld [vmem:[%s5 + $0x24] sm:$0xf]
  %v848 = vld [vmem:[%s5 + $0x28] sm:$0xf]
  %v849 = vld [vmem:[%s5 + $0x2c] sm:$0xf]
  %v850 = vld [vmem:[%s5 + $0x30] sm:$0xf]
  %v851 = vld [vmem:[%s5 + $0x34] sm:$0xf]
  %v852 = vld [vmem:[%s5 + $0x38] sm:$0xf]
  %v853 = vld [vmem:[%s5 + $0x3c] sm:$0xf]
  %v854 = vld [vmem:[%s6] sm:$0x1]
  %v856 = vperm.slane %v854, 0
  %v874 = vunpack.c.l.b16 %v838
  %v875 = vunpack.c.l.b16 %v839
  %v876 = vunpack.c.l.b16 %v840
  %v877 = vunpack.c.l.b16 %v841
  %v878 = vunpack.c.l.b16 %v842
  %v879 = vunpack.c.l.b16 %v843
  %v880 = vunpack.c.l.b16 %v844
  %v881 = vunpack.c.l.b16 %v845
  %v882 = vunpack.c.l.b16 %v846
  %v883 = vunpack.c.l.b16 %v847
  %v884 = vunpack.c.l.b16 %v848
  %v885 = vunpack.c.l.b16 %v849
  %v886 = vunpack.c.l.b16 %v850
  %v887 = vunpack.c.l.b16 %v851
  %v888 = vunpack.c.l.b16 %v852
  %v889 = vunpack.c.l.b16 %v853
  %v890 = vpack.c.b16 %v875, %v874
  %v891 = vpack.c.b16 %v877, %v876
  %v892 = vpack.c.b16 %v879, %v878
  %v893 = vpack.c.b16 %v881, %v880
  %v894 = vpack.c.b16 %v883, %v882
  %v895 = vpack.c.b16 %v885, %v884
  %v896 = vpack.c.b16 %v887, %v886
  %v897 = vpack.c.b16 %v889, %v888
  %906 = vmatpush.bf16.msra.mxu0 %v897
  %907 = vmatpush.bf16.msra.mxu0 %v896
  %908 = vmatpush.bf16.msra.mxu0 %v895
  %909 = vmatpush.bf16.msra.mxu0 %v894
  %910 = vmatpush.bf16.msra.mxu0 %v893
  %911 = vmatpush.bf16.msra.mxu0 %v892
  %912 = vmatpush.bf16.msra.mxu0 %v891
  %913 = vmatpush.bf16.msra.mxu0 %v890
  %914 = vmatmul.bf16.gmra.mxu0 %v806
  %v915 = vpop.f32.mrf.mxu0
  %v916 = vadd.f32 %v856, %v915
  %v917 = vpop.f32.mrf.mxu0
  %v918 = vadd.f32 %v856, %v917
  %919 = vmatmul.bf16.gmra.mxu0 %v807
  %v920 = vpop.f32.mrf.mxu0
  %v921 = vadd.f32 %v856, %v920
  %v922 = vpop.f32.mrf.mxu0
  %v923 = vadd.f32 %v856, %v922
  %924 = vmatmul.bf16.gmra.mxu0 %v808
  %v925 = vpop.f32.mrf.mxu0
  %v926 = vadd.f32 %v856, %v925
  %v927 = vpop.f32.mrf.mxu0
  %v928 = vadd.f32 %v856, %v927
  %929 = vmatmul.bf16.gmra.mxu0 %v809
  %v930 = vpop.f32.mrf.mxu0
  %v931 = vadd.f32 %v856, %v930
  %v932 = vpop.f32.mrf.mxu0
  %v933 = vadd.f32 %v856, %v932
  %934 = vmatmul.bf16.gmra.mxu0 %v810
  %v935 = vpop.f32.mrf.mxu0
  %v936 = vadd.f32 %v856, %v935
  %v937 = vpop.f32.mrf.mxu0
  %v938 = vadd.f32 %v856, %v937
  %939 = vmatmul.bf16.gmra.mxu0 %v811
  %v940 = vpop.f32.mrf.mxu0
  %v941 = vadd.f32 %v856, %v940
  %v942 = vpop.f32.mrf.mxu0
  %v943 = vadd.f32 %v856, %v942
  %944 = vmatmul.bf16.gmra.mxu0 %v812
  %v945 = vpop.f32.mrf.mxu0
  %v946 = vadd.f32 %v856, %v945
  %v947 = vpop.f32.mrf.mxu0
  %v948 = vadd.f32 %v856, %v947
  %949 = vmatmul.bf16.gmra.mxu0 %v813
  %v950 = vpop.f32.mrf.mxu0
  %v951 = vadd.f32 %v856, %v950
  %v952 = vpop.f32.mrf.mxu0
  %v953 = vadd.f32 %v856, %v952
  %954 = vmatmul.bf16.gmra.mxu0 %v814
  %v955 = vpop.f32.mrf.mxu0
  %v956 = vadd.f32 %v856, %v955
  %v957 = vpop.f32.mrf.mxu0
  %v958 = vadd.f32 %v856, %v957
  %959 = vmatmul.bf16.gmra.mxu0 %v815
  %v960 = vpop.f32.mrf.mxu0
  %v961 = vadd.f32 %v856, %v960
  %v962 = vpop.f32.mrf.mxu0
  %v963 = vadd.f32 %v856, %v962
  %964 = vmatmul.bf16.gmra.mxu0 %v816
  %v965 = vpop.f32.mrf.mxu0
  %v966 = vadd.f32 %v856, %v965
  %v967 = vpop.f32.mrf.mxu0
  %v968 = vadd.f32 %v856, %v967
  %969 = vmatmul.bf16.gmra.mxu0 %v817
  %v970 = vpop.f32.mrf.mxu0
  %v971 = vadd.f32 %v856, %v970
  %v972 = vpop.f32.mrf.mxu0
  %v973 = vadd.f32 %v856, %v972
  %974 = vmatmul.bf16.gmra.mxu0 %v818
  %v975 = vpop.f32.mrf.mxu0
  %v976 = vadd.f32 %v856, %v975
  %v977 = vpop.f32.mrf.mxu0
  %v978 = vadd.f32 %v856, %v977
  %979 = vmatmul.bf16.gmra.mxu0 %v819
  %v980 = vpop.f32.mrf.mxu0
  %v981 = vadd.f32 %v856, %v980
  %v982 = vpop.f32.mrf.mxu0
  %v983 = vadd.f32 %v856, %v982
  %984 = vmatmul.bf16.gmra.mxu0 %v820
  %v985 = vpop.f32.mrf.mxu0
  %v986 = vadd.f32 %v856, %v985
  %v987 = vpop.f32.mrf.mxu0
  %v988 = vadd.f32 %v856, %v987
  %989 = vmatmul.bf16.gmra.mxu0 %v821
  %v990 = vpop.f32.mrf.mxu0
  %v991 = vadd.f32 %v856, %v990
  %v992 = vpop.f32.mrf.mxu0
  %v993 = vadd.f32 %v856, %v992
  %994 = vmatmul.bf16.gmra.mxu0 %v822
  %v995 = vpop.f32.mrf.mxu0
  %v996 = vadd.f32 %v856, %v995
  %v997 = vpop.f32.mrf.mxu0
  %v998 = vadd.f32 %v856, %v997
  %999 = vmatmul.bf16.gmra.mxu0 %v823
  %v1000 = vpop.f32.mrf.mxu0
  %v1001 = vadd.f32 %v856, %v1000
  %v1002 = vpop.f32.mrf.mxu0
  %v1003 = vadd.f32 %v856, %v1002
  %1004 = vmatmul.bf16.gmra.mxu0 %v824
  %v1005 = vpop.f32.mrf.mxu0
  %v1006 = vadd.f32 %v856, %v1005
  %v1007 = vpop.f32.mrf.mxu0
  %v1008 = vadd.f32 %v856, %v1007
  %1009 = vmatmul.bf16.gmra.mxu0 %v825
  %v1010 = vpop.f32.mrf.mxu0
  %v1011 = vadd.f32 %v856, %v1010
  %v1012 = vpop.f32.mrf.mxu0
  %v1013 = vadd.f32 %v856, %v1012
  %1014 = vmatmul.bf16.gmra.mxu0 %v826
  %v1015 = vpop.f32.mrf.mxu0
  %v1016 = vadd.f32 %v856, %v1015
  %v1017 = vpop.f32.mrf.mxu0
  %v1018 = vadd.f32 %v856, %v1017
  %1019 = vmatmul.bf16.gmra.mxu0 %v827
  %v1020 = vpop.f32.mrf.mxu0
  %v1021 = vadd.f32 %v856, %v1020
  %v1022 = vpop.f32.mrf.mxu0
  %v1023 = vadd.f32 %v856, %v1022
  %1024 = vmatmul.bf16.gmra.mxu0 %v828
  %v1025 = vpop.f32.mrf.mxu0
  %v1026 = vadd.f32 %v856, %v1025
  %v1027 = vpop.f32.mrf.mxu0
  %v1028 = vadd.f32 %v856, %v1027
  %1029 = vmatmul.bf16.gmra.mxu0 %v829
  %v1030 = vpop.f32.mrf.mxu0
  %v1031 = vadd.f32 %v856, %v1030
  %v1032 = vpop.f32.mrf.mxu0
  %v1033 = vadd.f32 %v856, %v1032
  %1034 = vmatmul.bf16.gmra.mxu0 %v830
  %v1035 = vpop.f32.mrf.mxu0
  %v1036 = vadd.f32 %v856, %v1035
  %v1037 = vpop.f32.mrf.mxu0
  %v1038 = vadd.f32 %v856, %v1037
  %1039 = vmatmul.bf16.gmra.mxu0 %v831
  %v1040 = vpop.f32.mrf.mxu0
  %v1041 = vadd.f32 %v856, %v1040
  %v1042 = vpop.f32.mrf.mxu0
  %v1043 = vadd.f32 %v856, %v1042
  %1044 = vmatmul.bf16.gmra.mxu0 %v832
  %v1045 = vpop.f32.mrf.mxu0
  %v1046 = vadd.f32 %v856, %v1045
  %v1047 = vpop.f32.mrf.mxu0
  %v1048 = vadd.f32 %v856, %v1047
  %1049 = vmatmul.bf16.gmra.mxu0 %v833
  %v1050 = vpop.f32.mrf.mxu0
  %v1051 = vadd.f32 %v856, %v1050
  %v1052 = vpop.f32.mrf.mxu0
  %v1053 = vadd.f32 %v856, %v1052
  %1054 = vmatmul.bf16.gmra.mxu0 %v834
  %v1055 = vpop.f32.mrf.mxu0
  %v1056 = vadd.f32 %v856, %v1055
  %v1057 = vpop.f32.mrf.mxu0
  %v1058 = vadd.f32 %v856, %v1057
  %1059 = vmatmul.bf16.gmra.mxu0 %v835
  %v1060 = vpop.f32.mrf.mxu0
  %v1061 = vadd.f32 %v856, %v1060
  %v1062 = vpop.f32.mrf.mxu0
  %v1063 = vadd.f32 %v856, %v1062
  %1064 = vmatmul.bf16.gmra.mxu0 %v836
  %v1065 = vpop.f32.mrf.mxu0
  %v1066 = vadd.f32 %v856, %v1065
  %v1067 = vpop.f32.mrf.mxu0
  %v1068 = vadd.f32 %v856, %v1067
  %1069 = vmatmul.bf16.gmra.mxu0 %v837
  %v1070 = vpop.f32.mrf.mxu0
  %v1071 = vadd.f32 %v856, %v1070
  %v1072 = vpop.f32.mrf.mxu0
  %v1073 = vadd.f32 %v856, %v1072
  %1074 = vdwg.mxu0
  %vm1075 = vcmask 64512
  %1076 = vst.msk [vmem:[%s7] sm:$0xff] %vm1075, %v916
  %1077 = vst.msk [vmem:[%s7 + $0x8] sm:$0xff] %vm1075, %v918
  %1078 = vst.msk [vmem:[%s7 + $0x10] sm:$0xff] %vm1075, %v921
  %1079 = vst.msk [vmem:[%s7 + $0x18] sm:$0xff] %vm1075, %v923
  %1080 = vst.msk [vmem:[%s7 + $0x20] sm:$0xff] %vm1075, %v926
  %1081 = vst.msk [vmem:[%s7 + $0x28] sm:$0xff] %vm1075, %v928
  %1082 = vst.msk [vmem:[%s7 + $0x30] sm:$0xff] %vm1075, %v931
  %1083 = vst.msk [vmem:[%s7 + $0x38] sm:$0xff] %vm1075, %v933
  %1084 = vst.msk [vmem:[%s7 + $0x40] sm:$0xff] %vm1075, %v936
  %1085 = vst.msk [vmem:[%s7 + $0x48] sm:$0xff] %vm1075, %v938
  %1086 = vst.msk [vmem:[%s7 + $0x50] sm:$0xff] %vm1075, %v941
  %1087 = vst.msk [vmem:[%s7 + $0x58] sm:$0xff] %vm1075, %v943
  %1088 = vst.msk [vmem:[%s7 + $0x60] sm:$0xff] %vm1075, %v946
  %1089 = vst.msk [vmem:[%s7 + $0x68] sm:$0xff] %vm1075, %v948
  %1090 = vst.msk [vmem:[%s7 + $0x70] sm:$0xff] %vm1075, %v951
  %1091 = vst.msk [vmem:[%s7 + $0x78] sm:$0xff] %vm1075, %v953
  %1092 = vst.msk [vmem:[%s7 + $0x80] sm:$0xff] %vm1075, %v956
  %1093 = vst.msk [vmem:[%s7 + $0x88] sm:$0xff] %vm1075, %v958
  %1094 = vst.msk [vmem:[%s7 + $0x90] sm:$0xff] %vm1075, %v961
  %1095 = vst.msk [vmem:[%s7 + $0x98] sm:$0xff] %vm1075, %v963
  %1096 = vst.msk [vmem:[%s7 + $0xa0] sm:$0xff] %vm1075, %v966
  %1097 = vst.msk [vmem:[%s7 + $0xa8] sm:$0xff] %vm1075, %v968
  %1098 = vst.msk [vmem:[%s7 + $0xb0] sm:$0xff] %vm1075, %v971
  %1099 = vst.msk [vmem:[%s7 + $0xb8] sm:$0xff] %vm1075, %v973
  %1100 = vst.msk [vmem:[%s7 + $0xc0] sm:$0xff] %vm1075, %v976
  %1101 = vst.msk [vmem:[%s7 + $0xc8] sm:$0xff] %vm1075, %v978
  %1102 = vst.msk [vmem:[%s7 + $0xd0] sm:$0xff] %vm1075, %v981
  %1103 = vst.msk [vmem:[%s7 + $0xd8] sm:$0xff] %vm1075, %v983
  %1104 = vst.msk [vmem:[%s7 + $0xe0] sm:$0xff] %vm1075, %v986
  %1105 = vst.msk [vmem:[%s7 + $0xe8] sm:$0xff] %vm1075, %v988
  %1106 = vst.msk [vmem:[%s7 + $0xf0] sm:$0xff] %vm1075, %v991
  %1107 = vst.msk [vmem:[%s7 + $0xf8] sm:$0xff] %vm1075, %v993
  %1108 = vst.msk [vmem:[%s7 + $0x100] sm:$0xff] %vm1075, %v996
  %1109 = vst.msk [vmem:[%s7 + $0x108] sm:$0xff] %vm1075, %v998
  %1110 = vst.msk [vmem:[%s7 + $0x110] sm:$0xff] %vm1075, %v1001
  %1111 = vst.msk [vmem:[%s7 + $0x118] sm:$0xff] %vm1075, %v1003
  %1112 = vst.msk [vmem:[%s7 + $0x120] sm:$0xff] %vm1075, %v1006
  %1113 = vst.msk [vmem:[%s7 + $0x128] sm:$0xff] %vm1075, %v1008
  %1114 = vst.msk [vmem:[%s7 + $0x130] sm:$0xff] %vm1075, %v1011
  %1115 = vst.msk [vmem:[%s7 + $0x138] sm:$0xff] %vm1075, %v1013
  %1116 = vst.msk [vmem:[%s7 + $0x140] sm:$0xff] %vm1075, %v1016
  %1117 = vst.msk [vmem:[%s7 + $0x148] sm:$0xff] %vm1075, %v1018
  %1118 = vst.msk [vmem:[%s7 + $0x150] sm:$0xff] %vm1075, %v1021
  %1119 = vst.msk [vmem:[%s7 + $0x158] sm:$0xff] %vm1075, %v1023
  %1120 = vst.msk [vmem:[%s7 + $0x160] sm:$0xff] %vm1075, %v1026
  %1121 = vst.msk [vmem:[%s7 + $0x168] sm:$0xff] %vm1075, %v1028
  %1122 = vst.msk [vmem:[%s7 + $0x170] sm:$0xff] %vm1075, %v1031
  %1123 = vst.msk [vmem:[%s7 + $0x178] sm:$0xff] %vm1075, %v1033
  %1124 = vst.msk [vmem:[%s7 + $0x180] sm:$0xff] %vm1075, %v1036
  %1125 = vst.msk [vmem:[%s7 + $0x188] sm:$0xff] %vm1075, %v1038
  %1126 = vst.msk [vmem:[%s7 + $0x190] sm:$0xff] %vm1075, %v1041
  %1127 = vst.msk [vmem:[%s7 + $0x198] sm:$0xff] %vm1075, %v1043
  %1128 = vst.msk [vmem:[%s7 + $0x1a0] sm:$0xff] %vm1075, %v1046
  %1129 = vst.msk [vmem:[%s7 + $0x1a8] sm:$0xff] %vm1075, %v1048
  %1130 = vst.msk [vmem:[%s7 + $0x1b0] sm:$0xff] %vm1075, %v1051
  %1131 = vst.msk [vmem:[%s7 + $0x1b8] sm:$0xff] %vm1075, %v1053
  %1132 = vst.msk [vmem:[%s7 + $0x1c0] sm:$0xff] %vm1075, %v1056
  %1133 = vst.msk [vmem:[%s7 + $0x1c8] sm:$0xff] %vm1075, %v1058
  %1134 = vst.msk [vmem:[%s7 + $0x1d0] sm:$0xff] %vm1075, %v1061
  %1135 = vst.msk [vmem:[%s7 + $0x1d8] sm:$0xff] %vm1075, %v1063
  %1136 = vst.msk [vmem:[%s7 + $0x1e0] sm:$0xff] %vm1075, %v1066
  %1137 = vst.msk [vmem:[%s7 + $0x1e8] sm:$0xff] %vm1075, %v1068
  %1138 = vst.msk [vmem:[%s7 + $0x1f0] sm:$0xff] %vm1075, %v1071
  %1139 = vst.msk [vmem:[%s7 + $0x1f8] sm:$0xff] %vm1075, %v1073
  // Predicated region
  $region30: #{_dqn_pallas.1} parent=0 // pred_check
    _
  $region31: #{_dqn_pallas.1} parent=0 // pred_check_branch
    %1141 = sbr.rel (0) target = $region33
  $region32: #{_dqn_pallas.1} parent=0 // pred_region
    _
  $region33: #{_dqn_pallas.1} parent=0 // pred_fallthru
    _
  // Predicated region
  $region34: #{_dqn_pallas.1} parent=0 // pred_check
    _
  $region35: #{_dqn_pallas.1} parent=0 // pred_check_branch
    %1143 = sbr.rel (0) target = $region37
  $region36: #{_dqn_pallas.1} parent=0 // pred_region
    _
  $region37: #{_dqn_pallas.1} parent=0 // pred_fallthru
    _

</llo_original>
